<compile_context>
chip_gen: v6e
topology: v6e:2x2x1
jax: 0.10.0
libtpu: 0.0.40
codegen_flags: <defaults>
</compile_context>

<pallas_src>
import functools

import jax
import jax.numpy as jnp
from jax.experimental import pallas as pl
from jax.experimental.pallas import tpu as pltpu


def _round_up(x, m):
    return (x + m - 1) // m * m


def _mmd_rbf_tile_kernel(i_idx_ref, j_idx_ref,            # scalar prefetch (SMEM)
                         scale_ref, rows_ref, cols_ref,    # VMEM inputs
                         rmeta_ref, cmeta_ref,
                         out_ref,                          # VMEM output
                         acc_ref, *,                       # VMEM scratch
                         kernel_mul, kernel_num):
    t = pl.program_id(0)

    @pl.when(t == 0)
    def _init():
        acc_ref[...] = jnp.zeros_like(acc_ref)

    rows = rows_ref[...]                      # (tm, Dpad), input dtype
    cols = cols_ref[...]                      # (tn, Dpad), input dtype

    # Gram tile on the MXU; contract the feature dim of BOTH operands so no
    # explicit transpose / cross-lane shuffle is needed on the hot path.
    gram = jax.lax.dot_general(
        rows, cols,
        dimension_numbers=(((1,), (1,)), ((), ())),
        preferred_element_type=jnp.float32)   # (tm, tn) f32

    # Precomputed per-row metadata: [:, 0] squared L2 norm, [:, 1] quadrant
    # weight (+1/ns source, -1/nt target, 0 padded row).
    rmeta = rmeta_ref[...]                    # (tm, 2) f32
    cmeta = cmeta_ref[...]                    # (2, tn) f32
    sq_r = rmeta[:, 0:1]                      # (tm, 1)
    w_r = rmeta[:, 1:2]                       # (tm, 1)
    sq_c = cmeta[0:1, :]                      # (1, tn)
    w_c = cmeta[1:2, :]                       # (1, tn)

    # ||xi - xj||^2; clamp tiny negatives from the gram-matrix formulation.
    l2 = jnp.maximum(sq_r + sq_c - 2.0 * gram, 0.0)

    # Multi-scale RBF sum.  scale_ref holds -1 / widest_bandwidth where
    # widest_bandwidth = bandwidth * kernel_mul**(kernel_num-1) (data
    # dependent, computed in closed form in the wrapper).
    neg_inv_bw_widest = scale_ref[0, 0]
    if float(kernel_mul) == 2.0:
        # One exp per element; remaining scales by repeated squaring:
        #   exp(-l2/bw_{k-1})^(2^s) == exp(-l2/bw_{k-1-s})   (exact for mul=2)
        e = jnp.exp(l2 * neg_inv_bw_widest)
        ksum = e
        for _ in range(kernel_num - 1):
            e = e * e
            ksum = ksum + e
    else:
        # General fallback: still no per-element divide (scalar factors only).
        ksum = jnp.zeros_like(l2)
        for s in range(kernel_num):
            f = float(kernel_mul) ** (kernel_num - 1 - s)
            ksum = ksum + jnp.exp(l2 * (neg_inv_bw_widest * f))

    # Weighted tile sum: sum_ij w_i * w_j * k_ij  (== XX + YY - XY - YX
    # contribution of this tile).
    col_weighted = jnp.sum(ksum * w_c, axis=1, keepdims=True)   # (tm, 1)
    tile_sum = jnp.sum(col_weighted * w_r)                      # scalar

    # Symmetric-tile factor: diagonal tiles once, off-diagonal tiles twice
    # (kernel matrix and weight outer-product are both symmetric).
    tile_factor = jnp.where(i_idx_ref[t] == j_idx_ref[t],
                            jnp.float32(1.0), jnp.float32(2.0))
    acc_ref[...] = acc_ref[...] + tile_factor * tile_sum

    @pl.when(t == pl.num_programs(0) - 1)
    def _finish():
        out_ref[...] = acc_ref[...]


def mmd_loss_rbf(source, target, kernel_mul=2.0, kernel_num=5, max_tile=256):
    """Pallas TPU implementation of MMD_loss(kernel_type='rbf').forward."""
    assert source.ndim == 2 and target.ndim == 2
    assert source.shape[1] == target.shape[1]
    assert max_tile % 128 == 0, "max_tile must be a multiple of 128"
    ns, d = source.shape
    nt = target.shape[0]
    n = ns + nt

    # Single concatenation in the native input dtype (the gram matmul runs in
    # that dtype; only the distance / exp math is promoted to f32 in-kernel).
    total = jnp.concatenate([source, target.astype(source.dtype)], axis=0)

    # Per-row squared norms in f32 (reused both for the bandwidth and as the
    # in-kernel gram -> L2 conversion).
    tot_f = total.astype(jnp.float32)
    sq = jnp.sum(tot_f * tot_f, axis=1)                       # (n,)

    # Data-dependent bandwidth (fix_sigma=None path), closed form over the
    # UNPADDED data:  sum_ij ||xi-xj||^2 = 2*n*sum_i||xi||^2 - 2*||sum_i xi||^2
    col_sum = jnp.sum(tot_f, axis=0)
    sum_l2 = 2.0 * n * jnp.sum(sq) - 2.0 * jnp.dot(col_sum, col_sum)
    bandwidth = sum_l2 / float(n * n - n)
    bandwidth = bandwidth / (float(kernel_mul) ** (kernel_num // 2))
    widest_bw = bandwidth * (float(kernel_mul) ** (kernel_num - 1))
    # NOTE: like the PyTorch original, bandwidth == 0 (source == target)
    # yields inf/nan; semantics kept identical on purpose.
    scale = (-1.0 / widest_bw).reshape(1, 1).astype(jnp.float32)

    # Pad features to a lane multiple of 128 (zero padding does not change L2
    # distances) and rows to a tile multiple (padded rows get weight 0).
    d_pad = max(128, _round_up(d, 128))
    tile = min(int(max_tile), _round_up(n, 8))
    n_pad = _round_up(n, tile)
    total_p = jnp.pad(total, ((0, n_pad - n), (0, d_pad - d)))

    # Packed per-row metadata: [squared norm, signed quadrant weight].
    sq_pad = jnp.pad(sq, (0, n_pad - n))
    idx = jnp.arange(n_pad)
    w = jnp.where(idx < ns, 1.0 / float(ns),
                  jnp.where(idx < n, -1.0 / float(nt), 0.0)).astype(jnp.float32)
    row_meta = jnp.stack([sq_pad, w], axis=1)                 # (n_pad, 2)
    col_meta = jnp.transpose(row_meta)                        # (2, n_pad)

    # Upper-triangular tile schedule (scalar-prefetched block indices).
    n_tiles = n_pad // tile
    tri = [(i, j) for i in range(n_tiles) for j in range(i, n_tiles)]
    i_idx = jnp.asarray([p[0] for p in tri], dtype=jnp.int32)
    j_idx = jnp.asarray([p[1] for p in tri], dtype=jnp.int32)
    n_tri = len(tri)

    kernel = functools.partial(
        _mmd_rbf_tile_kernel,
        kernel_mul=float(kernel_mul), kernel_num=int(kernel_num))

    out = pl.pallas_call(
        kernel,
        out_shape=jax.ShapeDtypeStruct((1, 1), jnp.float32),
        grid_spec=pltpu.PrefetchScalarGridSpec(
            num_scalar_prefetch=2,
            grid=(n_tri,),
            in_specs=[
                pl.BlockSpec((1, 1), lambda t, ii, jj: (0, 0)),         # -1/bw
                pl.BlockSpec((tile, d_pad), lambda t, ii, jj: (ii[t], 0)),  # rows
                pl.BlockSpec((tile, d_pad), lambda t, ii, jj: (jj[t], 0)),  # cols
                pl.BlockSpec((tile, 2), lambda t, ii, jj: (ii[t], 0)),   # row meta
                pl.BlockSpec((2, tile), lambda t, ii, jj: (0, jj[t])),   # col meta
            ],
            out_specs=pl.BlockSpec((1, 1), lambda t, ii, jj: (0, 0)),
            scratch_shapes=[pltpu.VMEM((1, 1), jnp.float32)],
        ),
        compiler_params=pltpu.CompilerParams(
            # Single scalar output accumulated across the whole grid -> the
            # (only) grid axis is a reduction axis.
            dimension_semantics=("arbitrary",)),
    )(i_idx, j_idx, scale, total_p, total_p, row_meta, col_meta)
    return out[0, 0]


def _mmd_loss_rbf_ref(source, target, kernel_mul=2.0, kernel_num=5):
    """Pure-JAX reference mirroring the PyTorch module exactly."""
    source = source.astype(jnp.float32)
    target = target.astype(jnp.float32)
    b = source.shape[0]
    total = jnp.concatenate([source, target], axis=0)
    n = total.shape[0]
    diff = total[None, :, :] - total[:, None, :]
    l2 = jnp.sum(diff * diff, axis=2)
    bandwidth = jnp.sum(l2) / (n * n - n)
    bandwidth = bandwidth / (kernel_mul ** (kernel_num // 2))
    kernels = sum(jnp.exp(-l2 / (bandwidth * kernel_mul ** i))
                  for i in range(kernel_num))
    xx = jnp.mean(kernels[:b, :b])
    yy = jnp.mean(kernels[b:, b:])
    xy = jnp.mean(kernels[:b, b:])
    yx = jnp.mean(kernels[b:, :b])
    return xx + yy - xy - yx


if __name__ == "__main__":
    key = jax.random.PRNGKey(0)
    k1, k2, k3, k4 = jax.random.split(key, 4)

    # Small case (single tile).
    batch, hidden = 8, 32
    source = jax.random.normal(k1, (batch, hidden), dtype=jnp.float32)
    target = jax.random.normal(k2, (batch, hidden), dtype=jnp.float32) + 0.5
    loss = jax.block_until_ready(mmd_loss_rbf(source, target))
    ref = _mmd_loss_rbf_ref(source, target)
    assert jnp.allclose(loss, ref, rtol=5e-4, atol=1e-5), (loss, ref)

    # Larger case exercising the multi-tile triangular grid + row padding.
    src_big = jax.random.normal(k3, (160, hidden), dtype=jnp.float32)
    tgt_big = jax.random.normal(k4, (160, hidden), dtype=jnp.float32) + 0.3
    loss_big = jax.block_until_ready(mmd_loss_rbf(src_big, tgt_big))
    ref_big = _mmd_loss_rbf_ref(src_big, tgt_big)
    assert jnp.allclose(loss_big, ref_big, rtol=2e-3, atol=1e-5), (loss_big, ref_big)

    print("KERNEL_OK")
</pallas_src>

<mosaic_0001>
module attributes {stable_mosaic.version = 11 : i64} {
  func.func @_mmd_rbf_tile_kernel(%arg0: i32, %arg1: memref<1xi32, #tpu.memory_space<smem>>, %arg2: memref<1xi32, #tpu.memory_space<smem>>, %arg3: memref<1x1xf32, #tpu.memory_space<vmem>>, %arg4: memref<16x128xf32, #tpu.memory_space<vmem>>, %arg5: memref<16x128xf32, #tpu.memory_space<vmem>>, %arg6: memref<16x2xf32, #tpu.memory_space<vmem>>, %arg7: memref<2x16xf32, #tpu.memory_space<vmem>>, %arg8: memref<1x1xf32, #tpu.memory_space<vmem>>, %arg9: memref<1x1xf32, #tpu.memory_space<vmem>>) attributes {dimension_semantics = [#tpu.dimension_semantics<arbitrary>], iteration_bounds = array<i64: 1>, scalar_prefetch = 2 : i64, scratch_operands = 1 : i64, tpu.core_type = #tpu.core_type<tc>, window_params = [{pipeline_mode = #tpu.pipeline_mode<synchronous>, transform_indices = @transform_0, window_bounds = array<i64: 1, 1>}, {transform_indices = @transform_1, window_bounds = array<i64: 16, 128>}, {transform_indices = @transform_2, window_bounds = array<i64: 16, 128>}, {transform_indices = @transform_3, window_bounds = array<i64: 16, 2>}, {transform_indices = @transform_4, window_bounds = array<i64: 2, 16>}, {pipeline_mode = #tpu.pipeline_mode<synchronous>, transform_indices = @transform_5, window_bounds = array<i64: 1, 1>}]} {
    %c0_i32 = arith.constant 0 : i32
    %0 = arith.cmpi eq, %arg0, %c0_i32 : i32
    %1 = arith.extui %0 : i1 to i32
    %c0_i32_0 = arith.constant 0 : i32
    %2 = arith.cmpi ne, %1, %c0_i32_0 : i32
    scf.if %2 {
      %cst_22 = arith.constant 0.000000e+00 : f32
      %56 = vector.broadcast %cst_22 : f32 to vector<1x1xf32>
      %c0_23 = arith.constant 0 : index
      %c0_24 = arith.constant 0 : index
      %57 = vector.load %arg9[%c0_23, %c0_24] : memref<1x1xf32, #tpu.memory_space<vmem>>, vector<1x1xf32>
      tpu.vector_store %arg9[%c0_23, %c0_24], %56 {strides = array<i32>} : memref<1x1xf32, #tpu.memory_space<vmem>>, vector<1x1xf32>,
    } else {
    }
    %c0 = arith.constant 0 : index
    %c0_1 = arith.constant 0 : index
    %3 = vector.load %arg4[%c0, %c0_1] : memref<16x128xf32, #tpu.memory_space<vmem>>, vector<16x128xf32>
    %c0_2 = arith.constant 0 : index
    %c0_3 = arith.constant 0 : index
    %4 = vector.load %arg5[%c0_2, %c0_3] : memref<16x128xf32, #tpu.memory_space<vmem>>, vector<16x128xf32>
    %cst = arith.constant dense<0.000000e+00> : vector<16x16xf32>
    %5 = tpu.matmul %3, %4, %cst {dimension_numbers = #tpu.dot_dimension_numbers<[1], [1], [0], [0], [0, 0, 1, 0], [], []>} : vector<16x128xf32>, vector<16x128xf32>, vector<16x16xf32> -> vector<16x16xf32>
    %c0_4 = arith.constant 0 : index
    %c0_5 = arith.constant 0 : index
    %6 = vector.load %arg6[%c0_4, %c0_5] : memref<16x2xf32, #tpu.memory_space<vmem>>, vector<16x2xf32>
    %c0_6 = arith.constant 0 : index
    %c0_7 = arith.constant 0 : index
    %7 = vector.load %arg7[%c0_6, %c0_7] : memref<2x16xf32, #tpu.memory_space<vmem>>, vector<2x16xf32>
    %8 = vector.extract_strided_slice %6 {offsets = [0, 0], sizes = [16, 1], strides = [1, 1]} : vector<16x2xf32> to vector<16x1xf32>
    %9 = vector.extract_strided_slice %6 {offsets = [0, 1], sizes = [16, 1], strides = [1, 1]} : vector<16x2xf32> to vector<16x1xf32>
    %10 = vector.extract_strided_slice %7 {offsets = [0, 0], sizes = [1, 16], strides = [1, 1]} : vector<2x16xf32> to vector<1x16xf32>
    %11 = vector.extract_strided_slice %7 {offsets = [1, 0], sizes = [1, 16], strides = [1, 1]} : vector<2x16xf32> to vector<1x16xf32>
    %12 = vector.broadcast %8 : vector<16x1xf32> to vector<16x16xf32>
    %13 = vector.broadcast %10 : vector<1x16xf32> to vector<16x16xf32>
    %14 = arith.addf %12, %13 : vector<16x16xf32>
    %cst_8 = arith.constant 2.000000e+00 : f32
    %15 = vector.broadcast %cst_8 : f32 to vector<16x16xf32>
    %16 = arith.mulf %15, %5 : vector<16x16xf32>
    %17 = arith.subf %14, %16 : vector<16x16xf32>
    %cst_9 = arith.constant 0.000000e+00 : f32
    %18 = vector.broadcast %cst_9 : f32 to vector<16x16xf32>
    %19 = arith.maximumf %17, %18 : vector<16x16xf32>
    %c0_10 = arith.constant 0 : index
    %c0_11 = arith.constant 0 : index
    %20 = vector.load %arg3[%c0_10, %c0_11] : memref<1x1xf32, #tpu.memory_space<vmem>>, vector<1x1xf32>
    %21 = vector.extract %20[0, 0] : f32 from vector<1x1xf32>
    %22 = vector.broadcast %21 : f32 to vector<16x16xf32>
    %23 = arith.mulf %19, %22 : vector<16x16xf32>
    %24 = math.exp %23 : vector<16x16xf32>
    %25 = arith.mulf %24, %24 : vector<16x16xf32>
    %26 = arith.addf %24, %25 : vector<16x16xf32>
    %27 = arith.mulf %25, %25 : vector<16x16xf32>
    %28 = arith.addf %26, %27 : vector<16x16xf32>
    %29 = arith.mulf %27, %27 : vector<16x16xf32>
    %30 = arith.addf %28, %29 : vector<16x16xf32>
    %31 = arith.mulf %29, %29 : vector<16x16xf32>
    %32 = arith.addf %30, %31 : vector<16x16xf32>
    %33 = vector.broadcast %11 : vector<1x16xf32> to vector<16x16xf32>
    %34 = arith.mulf %32, %33 : vector<16x16xf32>
    %cst_12 = arith.constant dense<0.000000e+00> : vector<16xf32>
    %35 = vector.multi_reduction <add>, %34, %cst_12 [1] : vector<16x16xf32> to vector<16xf32>
    %36 = vector.shape_cast %35 : vector<16xf32> to vector<16x1xf32>
    %37 = arith.mulf %36, %9 : vector<16x1xf32>
    %38 = vector.shape_cast %37 : vector<16x1xf32> to vector<1x16x1xf32>
    %cst_13 = arith.constant dense<0.000000e+00> : vector<1xf32>
    %39 = vector.multi_reduction <add>, %38, %cst_13 [1, 2] : vector<1x16x1xf32> to vector<1xf32>
    %40 = vector.shape_cast %39 : vector<1xf32> to vector<1x1x1xf32>
    %41 = vector.extract %40[0, 0, 0] : f32 from vector<1x1x1xf32>
    %42 = arith.index_cast %arg0 : i32 to index
    %43 = memref.load %arg1[%42] : memref<1xi32, #tpu.memory_space<smem>>
    %44 = arith.index_cast %arg0 : i32 to index
    %45 = memref.load %arg2[%44] : memref<1xi32, #tpu.memory_space<smem>>
    %46 = arith.cmpi eq, %43, %45 : i32
    %cst_14 = arith.constant 1.000000e+00 : f32
    %cst_15 = arith.constant 2.000000e+00 : f32
    %47 = arith.select %46, %cst_14, %cst_15 : f32
    %c0_16 = arith.constant 0 : index
    %c0_17 = arith.constant 0 : index
    %48 = vector.load %arg9[%c0_16, %c0_17] : memref<1x1xf32, #tpu.memory_space<vmem>>, vector<1x1xf32>
    %49 = arith.mulf %47, %41 : f32
    %50 = vector.broadcast %49 : f32 to vector<1x1xf32>
    %51 = arith.addf %48, %50 : vector<1x1xf32>
    %c0_18 = arith.constant 0 : index
    %c0_19 = arith.constant 0 : index
    %52 = vector.load %arg9[%c0_18, %c0_19] : memref<1x1xf32, #tpu.memory_space<vmem>>, vector<1x1xf32>
    tpu.vector_store %arg9[%c0_18, %c0_19], %51 {strides = array<i32>} : memref<1x1xf32, #tpu.memory_space<vmem>>, vector<1x1xf32>,
    %c0_i32_20 = arith.constant 0 : i32
    %53 = arith.cmpi eq, %arg0, %c0_i32_20 : i32
    %54 = arith.extui %53 : i1 to i32
    %c0_i32_21 = arith.constant 0 : i32
    %55 = arith.cmpi ne, %54, %c0_i32_21 : i32
    scf.if %55 {
      %c0_22 = arith.constant 0 : index
      %c0_23 = arith.constant 0 : index
      %56 = vector.load %arg9[%c0_22, %c0_23] : memref<1x1xf32, #tpu.memory_space<vmem>>, vector<1x1xf32>
      %c0_24 = arith.constant 0 : index
      %c0_25 = arith.constant 0 : index
      %57 = vector.load %arg8[%c0_24, %c0_25] : memref<1x1xf32, #tpu.memory_space<vmem>>, vector<1x1xf32>
      tpu.vector_store %arg8[%c0_24, %c0_25], %56 {strides = array<i32>} : memref<1x1xf32, #tpu.memory_space<vmem>>, vector<1x1xf32>,
    } else {
    }
    return
  }
  func.func @transform_0(%arg0: i32, %arg1: memref<1xi32, #tpu.memory_space<smem>>, %arg2: memref<1xi32, #tpu.memory_space<smem>>) -> (i32, i32) {
    %c0_i32 = arith.constant 0 : i32
    %c0_i32_0 = arith.constant 0 : i32
    %c0_i32_1 = arith.constant 0 : i32
    return %c0_i32, %c0_i32_0 : i32, i32
  }
  func.func @transform_1(%arg0: i32, %arg1: memref<1xi32, #tpu.memory_space<smem>>, %arg2: memref<1xi32, #tpu.memory_space<smem>>) -> (i32, i32) {
    %0 = arith.index_cast %arg0 : i32 to index
    %1 = memref.load %arg1[%0] : memref<1xi32, #tpu.memory_space<smem>>
    %c0_i32 = arith.constant 0 : i32
    %c0_i32_0 = arith.constant 0 : i32
    return %1, %c0_i32 : i32, i32
  }
  func.func @transform_2(%arg0: i32, %arg1: memref<1xi32, #tpu.memory_space<smem>>, %arg2: memref<1xi32, #tpu.memory_space<smem>>) -> (i32, i32) {
    %0 = arith.index_cast %arg0 : i32 to index
    %1 = memref.load %arg2[%0] : memref<1xi32, #tpu.memory_space<smem>>
    %c0_i32 = arith.constant 0 : i32
    %c0_i32_0 = arith.constant 0 : i32
    return %1, %c0_i32 : i32, i32
  }
  func.func @transform_3(%arg0: i32, %arg1: memref<1xi32, #tpu.memory_space<smem>>, %arg2: memref<1xi32, #tpu.memory_space<smem>>) -> (i32, i32) {
    %0 = arith.index_cast %arg0 : i32 to index
    %1 = memref.load %arg1[%0] : memref<1xi32, #tpu.memory_space<smem>>
    %c0_i32 = arith.constant 0 : i32
    %c0_i32_0 = arith.constant 0 : i32
    return %1, %c0_i32 : i32, i32
  }
  func.func @transform_4(%arg0: i32, %arg1: memref<1xi32, #tpu.memory_space<smem>>, %arg2: memref<1xi32, #tpu.memory_space<smem>>) -> (i32, i32) {
    %0 = arith.index_cast %arg0 : i32 to index
    %1 = memref.load %arg2[%0] : memref<1xi32, #tpu.memory_space<smem>>
    %c0_i32 = arith.constant 0 : i32
    %c0_i32_0 = arith.constant 0 : i32
    return %c0_i32, %1 : i32, i32
  }
  func.func @transform_5(%arg0: i32, %arg1: memref<1xi32, #tpu.memory_space<smem>>, %arg2: memref<1xi32, #tpu.memory_space<smem>>) -> (i32, i32) {
    %c0_i32 = arith.constant 0 : i32
    %c0_i32_0 = arith.constant 0 : i32
    %c0_i32_1 = arith.constant 0 : i32
    return %c0_i32, %c0_i32_0 : i32, i32
  }
}

</mosaic_0001>

<llo_original>
// kernel: tpu_custom_call.1
$region0: #{tpu_custom_call.1}
  #allocation0 [shape = 'u32[]', space=smem, size = 0x4, offset = 0x4, fixed_abs, tag = 'smem constant byte address 0x4 - core index']
  #allocation1 [shape = 'u32[144,128]{1,0:T(1,128)}', space=vmem, size = 0x12000, scoped, tag = 'internal scratch']
  #allocation2 [shape = 'f32[1,1]{1,0:T(1,128)}', space=vmem, size = 0x200, scoped, tag = 'scratch operand']
  #allocation3 [shape = 's32[1]{0}', space=sflag, size = 0x4, scoped, tag = 'scoped memory for tpu_custom_call.1']
  #allocation4 [shape = 's32[1]{0:T(128)S(6)}', space=smem, size = 0x200, scoped, tag = 'prefetched SMEM operand 0']
  #allocation5 [shape = 's32[1]{0:T(128)S(6)}', space=smem, size = 0x200, scoped, tag = 'prefetched SMEM operand 1']
  #allocation6 [shape = 'f32[1,1]{1,0:T(1,128)S(1)}', space=vmem, size = 0x200, scoped, tag = 'scoped memory for tpu_custom_call.1']
  %s0 = inlined_call_operand.<no memory space> [shape: s32[1], index: 0, kind: input, shape index: {}]
  %s1 = inlined_call_operand.<no memory space> [shape: s32[1], index: 1, kind: input, shape index: {}]
  %s2 = inlined_call_operand.<no memory space> [shape: f32[1,1], index: 2, kind: input, shape index: {}]
  %s3 = inlined_call_operand.vmem [shape: f32[16,128], index: 3, kind: input, shape index: {}]
  %s4 = inlined_call_operand.hbm [shape: f32[16,128], index: 4, kind: input, shape index: {}]
  %s5 = inlined_call_operand.vmem [shape: f32[16,2], index: 5, kind: input, shape index: {}]
  %s6 = inlined_call_operand.vmem [shape: f32[2,16], index: 6, kind: input, shape index: {}]
  %s7 = inlined_call_operand.hbm [shape: f32[1,1], index: 7, kind: output, shape index: {}]
  %s8 = sld [smem:[#allocation0]]
  $region42: #{tpu_custom_call.1} parent=0
    _
  %s10 = ssub.s32 1, %s8
  %s11 = scalar_select 0, %s10, %s8
  %12 = sst [smem:[#allocation4]] %s0
  %13 = sst [smem:[#allocation5]] %s1
  %v14 = vstv %s2
  %15 = vst [vmem:[#allocation6] sm:$0x1] %v14
  $region1: #{tpu_custom_call.1} parent=0
    #allocation7 [shape = 'u8[8192]{0}', space=vmem, size = 0x2000, scoped, tag = 'input window, operand 4, single buffered']
    #allocation8 [shape = 's32[1]{0}', space=sflag, size = 0x4, scoped, tag = 'scoped memory for tpu_custom_call.1']
    #allocation9 [shape = 's32[1]{0}', space=sflag, size = 0x4, scoped, tag = 'scoped memory for tpu_custom_call.1']
    #allocation10 [shape = 'u8[512]{0}', space=vmem, size = 0x400, scoped, tag = 'output window, operand 0, single buffered']
    %16 = vsyncpa [#allocation8], 0
    %17 = vsyncpa [#allocation9], 0
    // Predicated region
    $region2: #{tpu_custom_call.1} parent=1 // pred_check
      _
    $region3: #{tpu_custom_call.1} parent=1 // pred_check_branch
      %19 = sbr.rel (0) target = $region5
    $region4: #{tpu_custom_call.1} parent=1 // pred_region
      _
    $region5: #{tpu_custom_call.1} parent=1 // pred_fallthru
      _
    // Predicated region
    $region6: #{tpu_custom_call.1} parent=1 // pred_check
      _
    $region7: #{tpu_custom_call.1} parent=1 // pred_check_branch
      %21 = sbr.rel (0) target = $region9
    $region8: #{tpu_custom_call.1} parent=1 // pred_region
      %s22 = sld [smem:[#allocation4]]
      %s23 = smul.u32 2, %s22
      %p24 = scmp.lt.s32.totalorder %s23, 1
      %s25 = scalar_select %p24, %s23, 1
      %s26 = smul.addr %s25, 8
      %s27 = scalar_lea.vmem %s3, %s26
      %s28 = sld [smem:[#allocation4]]
      %s29 = smul.u32 2, %s28
    $region9: #{tpu_custom_call.1} parent=1 // pred_fallthru
      _
    // Predicated region
    $region10: #{tpu_custom_call.1} parent=1 // pred_check
      _
    $region11: #{tpu_custom_call.1} parent=1 // pred_check_branch
      %31 = sbr.rel (0) target = $region13
    $region12: #{tpu_custom_call.1} parent=1 // pred_region
      %s32 = sld [smem:[#allocation5]]
      %s33 = smul.u32 2, %s32
      %s35 = ssub.s32 256, 256
      %36 = vsyncadd [#allocation8], %s35
      %s37 = smul.addr %s33, 128
      %s38 = scalar_lea.hbm %s4, %s37
      %s39 = sshll.u32 [#allocation7], 4
      %s40 = int_to_ptr.vmem [resolvable:$true] %s39
      %45 = dma.hbm_to_vmem [thread:$0]  %s38, 256, %s40, [#allocation8], 128, 128, 8
    $region13: #{tpu_custom_call.1} parent=1 // pred_fallthru
      _
    // Predicated region
    $region14: #{tpu_custom_call.1} parent=1 // pred_check
      _
    $region15: #{tpu_custom_call.1} parent=1 // pred_check_branch
      %47 = sbr.rel (0) target = $region17
    $region16: #{tpu_custom_call.1} parent=1 // pred_region
      %s48 = sld [smem:[#allocation4]]
      %s49 = smul.u32 2, %s48
      %p50 = scmp.lt.s32.totalorder %s49, 1
      %s51 = scalar_select %p50, %s49, 1
      %s52 = smul.addr %s51, 8
      %s53 = scalar_lea.vmem %s5, %s52
      %s54 = sld [smem:[#allocation4]]
      %s55 = smul.u32 2, %s54
    $region17: #{tpu_custom_call.1} parent=1 // pred_fallthru
      _
    // Predicated region
    $region18: #{tpu_custom_call.1} parent=1 // pred_check
      _
    $region19: #{tpu_custom_call.1} parent=1 // pred_check_branch
      %57 = sbr.rel (0) target = $region21
    $region20: #{tpu_custom_call.1} parent=1 // pred_region
      %s58 = sld [smem:[#allocation5]]
      %p59 = scmp.lt.s32.totalorder %s58, 0
      %s60 = scalar_select %p59, %s58, 0
      %s61 = smul.addr %s60, 2
      %s62 = scalar_lea.vmem %s6, %s61
      %s63 = sld [smem:[#allocation5]]
    $region21: #{tpu_custom_call.1} parent=1 // pred_fallthru
      _
    // Predicated region
    $region22: #{tpu_custom_call.1} parent=1 // pred_check
      _
    $region23: #{tpu_custom_call.1} parent=1 // pred_check_branch
      %65 = sbr.rel (0) target = $region25
    $region24: #{tpu_custom_call.1} parent=1 // pred_region
      %66 = dma.done [#allocation8], 256
    $region25: #{tpu_custom_call.1} parent=1 // pred_fallthru
      _
    %s67 = sld [smem:[#allocation4]]
    %s68 = smul.u32 2, %s67
    %p69 = scmp.lt.s32.totalorder %s68, 1
    %s70 = scalar_select %p69, %s68, 1
    %s71 = smul.addr %s70, 8
    %s72 = scalar_lea.vmem %s3, %s71
    %s73 = sld [smem:[#allocation4]]
    %s74 = smul.u32 2, %s73
    %p75 = scmp.lt.s32.totalorder %s74, 1
    %s76 = scalar_select %p75, %s74, 1
    %s77 = smul.addr %s76, 8
    %s78 = scalar_lea.vmem %s5, %s77
    %s79 = sld [smem:[#allocation5]]
    %p80 = scmp.lt.s32.totalorder %s79, 0
    %s81 = scalar_select %p80, %s79, 0
    %s82 = smul.addr %s81, 2
    %s83 = scalar_lea.vmem %s6, %s82
    %s84 = sld [smem:[#allocation4]]
    %s85 = smul.u32 2, %s84
    %p86 = scmp.lt.s32.totalorder %s85, 1
    %s87 = scalar_select %p86, %s85, 1
    %s88 = smul.addr %s87, 8
    %s89 = scalar_lea.vmem %s3, %s88
    %s90 = sld [smem:[#allocation4]]
    %s91 = smul.u32 2, %s90
    %s92 = sld [smem:[#allocation5]]
    %s93 = smul.u32 2, %s92
    %s94 = sld [smem:[#allocation4]]
    %s95 = smul.u32 2, %s94
    %p96 = scmp.lt.s32.totalorder %s95, 1
    %s97 = scalar_select %p96, %s95, 1
    %s98 = smul.addr %s97, 8
    %s99 = scalar_lea.vmem %s5, %s98
    %s100 = sld [smem:[#allocation4]]
    %s101 = smul.u32 2, %s100
    %s102 = sld [smem:[#allocation5]]
    %p103 = scmp.lt.s32.totalorder %s102, 0
    %s104 = scalar_select %p103, %s102, 0
    %s105 = smul.addr %s104, 2
    %s106 = scalar_lea.vmem %s6, %s105
    %s107 = sld [smem:[#allocation5]]
    %p108 = scmp.eq.s32.totalorder 0, 0
    // Predicated region
    $region26: #{tpu_custom_call.1} parent=1 // pred_check
      %p109 = pneg %p108
    $region27: #{tpu_custom_call.1} parent=1 // pred_check_branch
      %111 = sbr.rel (%p109) target = $region29
    $region28: #{tpu_custom_call.1} parent=1 // pred_region
      %vm112 = vcmask 0
      %113 = vst.msk [vmem:[#allocation2] sm:$0x1] %vm112, 0.0
    $region29: #{tpu_custom_call.1} parent=1 // pred_fallthru
      _
    %v114 = vld [vmem:[%s89] sm:$0xff]
    %v115 = vld [vmem:[%s89 + $0x8] sm:$0xff]
    %v116 = vld [vmem:[#allocation7] sm:$0xff]
    %v117 = vld [vmem:[#allocation7 + $0x8] sm:$0xff]
    %118 = vmatprep.subr.mxu0 0.0
    %119 = vmatpush1.xpose.msra.mxu0 0.0
    %120 = vmatprep.subr.mxu0 0.0
    %121 = vmatpush1.xpose.msra.mxu0 0.0
    %122 = vmatprep.subr.mxu0 0.0
    %123 = vmatpush1.xpose.msra.mxu0 0.0
    %124 = vmatprep.subr.mxu0 0.0
    %125 = vmatpush1.xpose.msra.mxu0 0.0
    %126 = vmatprep.subr.mxu0 0.0
    %127 = vmatpush1.xpose.msra.mxu0 0.0
    %128 = vmatprep.subr.mxu0 0.0
    %129 = vmatpush1.xpose.msra.mxu0 0.0
    %130 = vmatprep.subr.mxu0 0.0
    %131 = vmatpush1.xpose.msra.mxu0 0.0
    %132 = vmatprep.subr.mxu0 0.0
    %133 = vmatpush1.xpose.msra.mxu0 0.0
    %134 = vmatprep.subr.mxu0 0.0
    %135 = vmatpush1.xpose.msra.mxu0 0.0
    %136 = vmatprep.subr.mxu0 0.0
    %137 = vmatpush1.xpose.msra.mxu0 0.0
    %138 = vmatprep.subr.mxu0 0.0
    %139 = vmatpush1.xpose.msra.mxu0 0.0
    %140 = vmatprep.subr.mxu0 0.0
    %141 = vmatpush1.xpose.msra.mxu0 0.0
    %142 = vmatprep.subr.mxu0 0.0
    %143 = vmatpush1.xpose.msra.mxu0 0.0
    %144 = vmatprep.subr.mxu0 0.0
    %145 = vmatpush1.xpose.msra.mxu0 0.0
    %146 = vmatprep.subr.mxu0 0.0
    %147 = vmatpush1.xpose.msra.mxu0 %v117
    %148 = vmatprep.subr.mxu0 0.0
    %149 = vmatpush1.xpose.msra.mxu0 %v116
    %150 = vmatprep.subr.mxu0 0.0
    %151 = vmatpush2.xpose.msra.mxu0 0.0
    %152 = vmatprep.subr.mxu0 0.0
    %153 = vmatpush2.xpose.msra.mxu0 0.0
    %154 = vmatprep.subr.mxu0 0.0
    %155 = vmatpush2.xpose.msra.mxu0 0.0
    %156 = vmatprep.subr.mxu0 0.0
    %157 = vmatpush2.xpose.msra.mxu0 0.0
    %158 = vmatprep.subr.mxu0 0.0
    %159 = vmatpush2.xpose.msra.mxu0 0.0
    %160 = vmatprep.subr.mxu0 0.0
    %161 = vmatpush2.xpose.msra.mxu0 0.0
    %162 = vmatprep.subr.mxu0 0.0
    %163 = vmatpush2.xpose.msra.mxu0 0.0
    %164 = vmatprep.subr.mxu0 0.0
    %165 = vmatpush2.xpose.msra.mxu0 0.0
    %166 = vmatprep.subr.mxu0 0.0
    %167 = vmatpush2.xpose.msra.mxu0 0.0
    %168 = vmatprep.subr.mxu0 0.0
    %169 = vmatpush2.xpose.msra.mxu0 0.0
    %170 = vmatprep.subr.mxu0 0.0
    %171 = vmatpush2.xpose.msra.mxu0 0.0
    %172 = vmatprep.subr.mxu0 0.0
    %173 = vmatpush2.xpose.msra.mxu0 0.0
    %174 = vmatprep.subr.mxu0 0.0
    %175 = vmatpush2.xpose.msra.mxu0 0.0
    %176 = vmatprep.subr.mxu0 0.0
    %177 = vmatpush2.xpose.msra.mxu0 0.0
    %178 = vmatprep.subr.mxu0 0.0
    %179 = vmatpush2.xpose.msra.mxu0 0.0
    %180 = vmatprep.subr.mxu0 0.0
    %181 = vmatpush2.xpose.msra.mxu0 0.0
    %182 = vmatprep.mubr.f32.mxu0 0.0
    %183 = vmatmul.mubr.f32.gmra.mxu0 %v114
    %v184 = vpop.f32.mrf.mxu0
    %v185 = vadd.f32 0.0, %v184
    %v186 = vpop.f32.mrf.mxu0
    %187 = vmatprep.mubr.f32.mxu0 0.0
    %188 = vmatmul.mubr.f32.gmra.mxu0 %v115
    %v189 = vpop.f32.mrf.mxu0
    %v190 = vadd.f32 0.0, %v189
    %v191 = vpop.f32.mrf.mxu0
    %192 = vdwg.mxu0
    %v193 = vld [vmem:[%s99] sm:$0xff]
    %v194 = vld [vmem:[%s99 + $0x8] sm:$0xff]
    %v195 = vld [vmem:[%s106] sm:$0x3]
    %197 = vset.pattern.permute.xlu0 0
    %198 = vperm.xlu0 %197, %v193
    %v199 = vpop.permute.xlu0 %198
    %202 = vset.pattern.permute.xlu0 0
    %203 = vperm.xlu0 %202, %v194
    %v204 = vpop.permute.xlu0 %203
    %v206 = vlaneseq
    %v207 = vshrl.u32 %v206, 7
    %v208 = vsub.s32 0, %v207
    %v209 = vrot.slane %v195, %v208
    %v210 = vadd.f32 %v199, %v209
    %v211 = vadd.f32 %v204, %v209
    %v212 = vmul.f32 %v185, 2.0
    %v213 = vmul.f32 %v190, 2.0
    %v214 = vsub.f32 %v210, %v212
    %v215 = vsub.f32 %v211, %v213
    %v216 = vmax.f32 %v214, 0.0
    %v217 = vmax.f32 %v215, 0.0
    %v218 = vld [vmem:[#allocation6] sm:$0x1]
    %s219 = vtos %v218
    %v220 = vstv %s219
    %v221 = vmul.f32 %v216, %v220
    %v222 = vmul.f32 %v217, %v220
    %v223 = vmul.f32 %v221, 1.442695
    %v224 = vpow.pop %v223
    %v225 = vmul.f32 %v222, 1.442695
    %v226 = vpow.pop %v225
    %v227 = vmul.f32 %v224, %v224
    %v228 = vmul.f32 %v226, %v226
    %v229 = vadd.f32 %v224, %v227
    %v230 = vadd.f32 %v226, %v228
    %v231 = vmul.f32 %v227, %v227
    %v232 = vmul.f32 %v228, %v228
    %v233 = vadd.f32 %v229, %v231
    %v234 = vadd.f32 %v230, %v232
    %v235 = vmul.f32 %v231, %v231
    %v236 = vmul.f32 %v232, %v232
    %v237 = vadd.f32 %v233, %v235
    %v238 = vadd.f32 %v234, %v236
    %v239 = vmul.f32 %v235, %v235
    %v240 = vmul.f32 %v236, %v236
    %v241 = vadd.f32 %v237, %v239
    %v242 = vadd.f32 %v238, %v240
    %v243 = vlaneseq
    %v244 = vshrl.u32 %v243, 7
    %v245 = vsub.s32 1, %v244
    %v246 = vrot.slane %v195, %v245
    %v247 = vmul.f32 %v241, %v246
    %v248 = vmul.f32 %v242, %v246
    %vm249 = vcmask 130048
    %v250 = vsel %vm249, %v247, 0.0
    %251 = vadd.xlane.f32.xlu0 %v250
    %v252 = vpop.xlane.xlu0 %251
    %v253 = vsel %vm249, %v248, 0.0
    %254 = vadd.xlane.f32.xlu0 %v253
    %v255 = vpop.xlane.xlu0 %254
    %v256 = vmul.f32 %v252, %v193
    %v257 = vmul.f32 %v255, %v194
    %260 = vrot.lane.b32.xlu0 %v256, 127
    %v261 = vpop.permute.xlu0 %260
    %262 = vrot.lane.b32.xlu0 %v257, 127
    %v263 = vpop.permute.xlu0 %262
    %vm266 = vcmask 7168
    %v267 = vsel %vm266, %v261, 0.0
    %v268 = vsel %vm266, %v263, 0.0
    %v269 = vadd.f32 %v267, %v268
    %270 = vadd.xlane.f32.xlu0 %v269
    %v271 = vpop.xlane.xlu0 %270
    %v272 = vrot.slane %v271, 4
    %v273 = vadd.f32 %v271, %v272
    %v274 = vrot.slane %v273, 2
    %v275 = vadd.f32 %v273, %v274
    %v276 = vrot.slane %v275, 1
    %v277 = vadd.f32 %v275, %v276
    %s278 = vtos %v277
    %s279 = sld [smem:[#allocation4]]
    %s280 = sld [smem:[#allocation5]]
    %p281 = scmp.eq.s32.totalorder %s279, %s280
    %s282 = scalar_select %p281, 1.0, 2.0
    %v283 = vld [vmem:[#allocation2] sm:$0x1]
    %s284 = smul.f32 %s282, %s278
    %v285 = vstv %s284
    %v286 = vadd.f32 %v283, %v285
    %vm287 = vcmask 0
    %288 = vst.msk [vmem:[#allocation2] sm:$0x1] %vm287, %v286
    // Predicated region
    $region30: #{tpu_custom_call.1} parent=1 // pred_check
      %p289 = pneg %p108
    $region31: #{tpu_custom_call.1} parent=1 // pred_check_branch
      %291 = sbr.rel (%p289) target = $region33
    $region32: #{tpu_custom_call.1} parent=1 // pred_region
      %v292 = vld [vmem:[#allocation2] sm:$0x1]
      %293 = vst.msk [vmem:[#allocation10] sm:$0x1] %vm287, %v292
    $region33: #{tpu_custom_call.1} parent=1 // pred_fallthru
      _
    // Predicated region
    $region34: #{tpu_custom_call.1} parent=1 // pred_check
      _
    $region35: #{tpu_custom_call.1} parent=1 // pred_check_branch
      %295 = sbr.rel (0) target = $region37
    $region36: #{tpu_custom_call.1} parent=1 // pred_region
      %s297 = ssub.s32 16, 16
      %298 = vsyncadd [#allocation9], %s297
      %s300 = sshll.u32 [#allocation10], 4
      %s301 = int_to_ptr.vmem [resolvable:$true] %s300
      %303 = dma.vmem_to_hbm [thread:$0]  %s301, 16, %s7, [#allocation9]
    $region37: #{tpu_custom_call.1} parent=1 // pred_fallthru
      _
    // Predicated region
    $region38: #{tpu_custom_call.1} parent=1 // pred_check
      _
    $region39: #{tpu_custom_call.1} parent=1 // pred_check_branch
      %305 = sbr.rel (0) target = $region41
    $region40: #{tpu_custom_call.1} parent=1 // pred_region
      %306 = dma.done [#allocation9], 16
    $region41: #{tpu_custom_call.1} parent=1 // pred_fallthru
      _
    %307 = vsyncpa [#allocation8], 1
    %308 = vsyncpa [#allocation9], 1

</llo_original>
